<compile_context>
chip_gen: v5e
topology: v5e:2x2
jax: 0.10.0
libtpu: 0.0.40
codegen_flags: <defaults>
</compile_context>

<pallas_src>
import jax
import jax.numpy as jnp
from jax.experimental import pallas as pl
from jax.experimental.pallas import tpu as pltpu


def linear_kernel(x_ref, w_ref, b_ref, o_ref):
    # x_ref: (TB, IN) f32, w_ref: (IN, OUT) f32, b_ref: (1, OUT) f32
    acc = jnp.dot(x_ref[...], w_ref[...], preferred_element_type=jnp.float32)
    o_ref[...] = (acc + b_ref[...]).astype(o_ref.dtype)


def prepare_params(weight, bias):
    """One-time param prep: weight (OUT, IN) -> (IN, OUT); bias (OUT,) -> (1, OUT).

    Done at init time so no transpose/reshape XLA op is paid per forward call.
    """
    return jnp.asarray(weight).T, jnp.asarray(bias).reshape(1, -1)


# Rows per grid step for the batched path.  >=256 amortizes the ~0.35 us
# per-step overhead and matches MXU-native tiling (2x256 on v6e/v7x, 4x128 on v5e).
_TILE_B = 256


@jax.jit
def linear_apply(x, w_t, b2d):
    """x: (B, IN); w_t: (IN, OUT); b2d: (1, OUT).  Returns (B, OUT)."""
    B, IN = x.shape
    OUT = w_t.shape[1]

    if B >= _TILE_B and B % _TILE_B == 0:
        # Batched path: grid over rows; weight/bias stay resident in VMEM.
        return pl.pallas_call(
            linear_kernel,
            out_shape=jax.ShapeDtypeStruct((B, OUT), x.dtype),
            grid=(B // _TILE_B,),
            in_specs=[
                pl.BlockSpec((_TILE_B, IN), lambda i: (i, 0)),
                pl.BlockSpec((IN, OUT), lambda i: (0, 0)),   # resident, no re-DMA
                pl.BlockSpec((1, OUT), lambda i: (0, 0)),    # resident, no re-DMA
            ],
            out_specs=pl.BlockSpec((_TILE_B, OUT), lambda i: (i, 0)),
            compiler_params=pltpu.CompilerParams(
                dimension_semantics=("parallel",)
            ),
        )(x, w_t, b2d)

    # Small-batch path (TestLinear spec shape, B=8): single grid-less call,
    # whole working set (~3 KB) lives in VMEM; no loop/pipeline scaffolding.
    return pl.pallas_call(
        linear_kernel,
        out_shape=jax.ShapeDtypeStruct((B, OUT), x.dtype),
        in_specs=[
            pl.BlockSpec(memory_space=pltpu.MemorySpace.VMEM),
            pl.BlockSpec(memory_space=pltpu.MemorySpace.VMEM),
            pl.BlockSpec(memory_space=pltpu.MemorySpace.VMEM),
        ],
        out_specs=pl.BlockSpec(memory_space=pltpu.MemorySpace.VMEM),
    )(x, w_t, b2d)


if __name__ == "__main__":
    key = jax.random.PRNGKey(0)
    kx, kw, kb, kx_big = jax.random.split(key, 4)

    B, IN, OUT = 8, 32, 16
    x = jax.random.uniform(kx, (B, IN), dtype=jnp.float32)
    # Deterministic params mimicking nn.Linear init (uniform(-1/sqrt(IN), 1/sqrt(IN)))
    bound = 1.0 / jnp.sqrt(jnp.float32(IN))
    weight = jax.random.uniform(kw, (OUT, IN), dtype=jnp.float32,
                                minval=-bound, maxval=bound)
    bias = jax.random.uniform(kb, (OUT,), dtype=jnp.float32,
                              minval=-bound, maxval=bound)

    # One-time param prep (hoisted out of the forward call path).
    w_t, b2d = prepare_params(weight, bias)

    # --- Spec shape: (8, 32) -> (8, 16), grid-less kernel. ---
    out = jax.block_until_ready(linear_apply(x, w_t, b2d))
    ref = x @ weight.T + bias
    assert out.shape == (B, OUT)
    assert jnp.allclose(out, ref, atol=1e-5, rtol=1e-5)

    # --- Batched path sanity check: (512, 32), grid=(2,), "parallel" axis. ---
    x_big = jax.random.uniform(kx_big, (2 * _TILE_B, IN), dtype=jnp.float32)
    out_big = jax.block_until_ready(linear_apply(x_big, w_t, b2d))
    ref_big = x_big @ weight.T + bias
    assert out_big.shape == (2 * _TILE_B, OUT)
    assert jnp.allclose(out_big, ref_big, atol=1e-5, rtol=1e-5)

    print("KERNEL_OK")
</pallas_src>

<mosaic_0001>
module attributes {stable_mosaic.version = 11 : i64} {
  func.func @linear_kernel(%arg0: memref<8x32xf32, #tpu.memory_space<vmem>>, %arg1: memref<32x16xf32, #tpu.memory_space<vmem>>, %arg2: memref<1x16xf32, #tpu.memory_space<vmem>>, %arg3: memref<8x16xf32, #tpu.memory_space<vmem>>) attributes {dimension_semantics = [], scalar_prefetch = 0 : i64, scratch_operands = 0 : i64, tpu.core_type = #tpu.core_type<tc>} {
    %c0 = arith.constant 0 : index
    %c0_0 = arith.constant 0 : index
    %0 = vector.load %arg0[%c0, %c0_0] : memref<8x32xf32, #tpu.memory_space<vmem>>, vector<8x32xf32>
    %c0_1 = arith.constant 0 : index
    %c0_2 = arith.constant 0 : index
    %1 = vector.load %arg1[%c0_1, %c0_2] : memref<32x16xf32, #tpu.memory_space<vmem>>, vector<32x16xf32>
    %cst = arith.constant dense<0.000000e+00> : vector<8x16xf32>
    %2 = tpu.matmul %0, %1, %cst {dimension_numbers = #tpu.dot_dimension_numbers<[1], [0], [0], [1], [0, 0, 1, 1], [], []>} : vector<8x32xf32>, vector<32x16xf32>, vector<8x16xf32> -> vector<8x16xf32>
    %c0_3 = arith.constant 0 : index
    %c0_4 = arith.constant 0 : index
    %3 = vector.load %arg2[%c0_3, %c0_4] : memref<1x16xf32, #tpu.memory_space<vmem>>, vector<1x16xf32>
    %4 = vector.broadcast %3 : vector<1x16xf32> to vector<8x16xf32>
    %5 = arith.addf %2, %4 : vector<8x16xf32>
    %c0_5 = arith.constant 0 : index
    %c0_6 = arith.constant 0 : index
    %6 = vector.load %arg3[%c0_5, %c0_6] : memref<8x16xf32, #tpu.memory_space<vmem>>, vector<8x16xf32>
    tpu.vector_store %arg3[%c0_5, %c0_6], %5 {strides = array<i32>} : memref<8x16xf32, #tpu.memory_space<vmem>>, vector<8x16xf32>,
    return
  }
}

</mosaic_0001>

<llo_original>
// kernel: linear_apply.1
$region0: #{linear_apply.1}
  #allocation0 [shape = 'u32[]', space=smem, size = 0x4, offset = 0x4, fixed_abs, tag = 'smem constant byte address 0x4 - core index']
  #allocation1 [shape = 'u32[72,128]{1,0:T(1,128)}', space=vmem, size = 0x9000, scoped, tag = 'internal scratch']
  %s0 = inlined_call_operand.vmem [shape: f32[8,32], index: 0, kind: input, shape index: {}]
  %s1 = inlined_call_operand.vmem [shape: f32[32,16], index: 1, kind: input, shape index: {}]
  %s2 = inlined_call_operand.vmem [shape: f32[1,16], index: 2, kind: input, shape index: {}]
  %s3 = inlined_call_operand.hbm [shape: f32[8,16], index: 3, kind: output, shape index: {}]
  %s4 = sld [smem:[#allocation0]]
  $region22: #{linear_apply.1} parent=0
    _
  %s6 = ssub.s32 1, %s4
  %s7 = scalar_select 0, %s6, %s4
  $region1: #{linear_apply.1} parent=0
    #allocation2 [shape = 'u8[4096]{0}', space=vmem, size = 0x1000, scoped, tag = 'output window, operand 0, single buffered']
    #allocation3 [shape = 's32[1]{0}', space=sflag, size = 0x4, scoped, tag = 'scoped memory for linear_apply.1']
    %8 = vsyncpa [#allocation3], 0
    // Predicated region
    $region2: #{linear_apply.1} parent=1 // pred_check
      _
    $region3: #{linear_apply.1} parent=1 // pred_check_branch
      %10 = sbr.rel (0) target = $region5
    $region4: #{linear_apply.1} parent=1 // pred_region
      _
    $region5: #{linear_apply.1} parent=1 // pred_fallthru
      _
    // Predicated region
    $region6: #{linear_apply.1} parent=1 // pred_check
      _
    $region7: #{linear_apply.1} parent=1 // pred_check_branch
      %12 = sbr.rel (0) target = $region9
    $region8: #{linear_apply.1} parent=1 // pred_region
      _
    $region9: #{linear_apply.1} parent=1 // pred_fallthru
      _
    // Predicated region
    $region10: #{linear_apply.1} parent=1 // pred_check
      _
    $region11: #{linear_apply.1} parent=1 // pred_check_branch
      %14 = sbr.rel (0) target = $region13
    $region12: #{linear_apply.1} parent=1 // pred_region
      _
    $region13: #{linear_apply.1} parent=1 // pred_fallthru
      _
    %v15 = vld [vmem:[%s0] sm:$0xff]
    %v16 = vld [vmem:[%s1] sm:$0xff]
    %v17 = vld [vmem:[%s1 + $0x8] sm:$0xff]
    %v18 = vld [vmem:[%s1 + $0x10] sm:$0xff]
    %v19 = vld [vmem:[%s1 + $0x18] sm:$0xff]
    %v20 = vld [vmem:[%s2] sm:$0x1]
    %v22 = vperm.slane %v20, 0
    %vm24 = vcmask 261120
    %v26 = vsel %vm24, %v15, 0
    %28 = vmatpush.msra.mxu0 0.0
    %29 = vmatpush.msra.mxu0 0.0
    %30 = vmatpush.msra.mxu0 0.0
    %31 = vmatpush.msra.mxu0 0.0
    %32 = vmatpush.msra.mxu0 0.0
    %33 = vmatpush.msra.mxu0 0.0
    %34 = vmatpush.msra.mxu0 0.0
    %35 = vmatpush.msra.mxu0 0.0
    %36 = vmatpush.msra.mxu0 0.0
    %37 = vmatpush.msra.mxu0 0.0
    %38 = vmatpush.msra.mxu0 0.0
    %39 = vmatpush.msra.mxu0 0.0
    %40 = vmatpush.msra.mxu0 %v19
    %41 = vmatpush.msra.mxu0 %v18
    %42 = vmatpush.msra.mxu0 %v17
    %43 = vmatpush.msra.mxu0 %v16
    %44 = vmatmul.f32.gmra.mxu0 %v26
    %v45 = vpop.f32.mrf.mxu0
    %v46 = vadd.f32 %v22, %v45
    %47 = vdwg.mxu0
    %vm48 = vcmask 130048
    %49 = vst.msk [vmem:[#allocation2] sm:$0xff] %vm48, %v46
    // Predicated region
    $region14: #{linear_apply.1} parent=1 // pred_check
      _
    $region15: #{linear_apply.1} parent=1 // pred_check_branch
      %51 = sbr.rel (0) target = $region17
    $region16: #{linear_apply.1} parent=1 // pred_region
      %53 = vsyncadd [#allocation3], 0
      %s55 = sshll.u32 [#allocation2], 4
      %s56 = int_to_ptr.vmem [resolvable:$true] %s55
      %s57 = sshll.u32 %s3, 4
      %s58 = int_to_ptr.hbm [resolvable:$true] %s57
      %60 = dma.vmem_to_hbm [thread:$0]  %s56, 128, %s58, [#allocation3]
    $region17: #{linear_apply.1} parent=1 // pred_fallthru
      _
    // Predicated region
    $region18: #{linear_apply.1} parent=1 // pred_check
      _
    $region19: #{linear_apply.1} parent=1 // pred_check_branch
      %62 = sbr.rel (0) target = $region21
    $region20: #{linear_apply.1} parent=1 // pred_region
      %64 = dma.done [#allocation3], 128
    $region21: #{linear_apply.1} parent=1 // pred_fallthru
      _
    %65 = vsyncpa [#allocation3], 1

</llo_original>
